<compile_context>
chip_gen: v7x
topology: tpu7x:2x2x1
jax: 0.10.0
libtpu: 0.0.40
codegen_flags: <defaults>
</compile_context>

<pallas_src>
import jax
import jax.numpy as jnp
from jax.experimental import pallas as pl
from jax.experimental.pallas import tpu as pltpu

_NEG_BIG = -1e30  # finite "-inf" bias for padded vocab columns


def _round_up(x, m):
    return (x + m - 1) // m * m


def _lse_kernel(x_ref, w_ref, b_ref, lse_ref, m_sc, l_sc):
    """Pass 1: online logsumexp.  grid = (vocab OUTER, rows INNER).

    m_sc / l_sc are (grid_rows, tm, 1) scratch holding per-row running
    max / sum-exp, indexed by the row-tile id so they persist across the
    outer vocab sweeps.
    """
    v = pl.program_id(0)
    i = pl.program_id(1)
    row_block = (m_sc.shape[1], m_sc.shape[2])

    @pl.when(v == 0)
    def _():
        m_sc[i] = jnp.full(row_block, -jnp.inf, jnp.float32)
        l_sc[i] = jnp.zeros(row_block, jnp.float32)

    # bf16 x bf16 matmul with f32 accumulation on the MXU; bias add in f32.
    logits = jnp.dot(x_ref[...], w_ref[...],
                     preferred_element_type=jnp.float32) + b_ref[...]

    m_prev = m_sc[i]
    m_new = jnp.maximum(m_prev, jnp.max(logits, axis=-1, keepdims=True))
    l_sc[i] = (l_sc[i] * jnp.exp(m_prev - m_new)
               + jnp.sum(jnp.exp(logits - m_new), axis=-1, keepdims=True))
    m_sc[i] = m_new

    @pl.when(v == pl.num_programs(0) - 1)
    def _():
        lse_ref[...] = m_sc[i] + jnp.log(l_sc[i])


def _out_kernel(x_ref, w_ref, b_ref, lse_ref, o_ref):
    """Pass 2: log_probs = logits - logsumexp.  Fully parallel grid."""
    logits = jnp.dot(x_ref[...], w_ref[...],
                     preferred_element_type=jnp.float32) + b_ref[...]
    o_ref[...] = (logits - lse_ref[...]).astype(o_ref.dtype)


def masked_language_model(x, weight_t, bias, *, tm=512, tv=1024,
                          out_dtype=jnp.bfloat16):
    """x: (B, S, H); weight_t: (H, V) = transpose of torch Linear weight;
    bias: (V,).  Returns (B, S, V) log-probabilities (out_dtype)."""
    B, S, H = x.shape
    Hw, V = weight_t.shape
    assert Hw == H
    M = B * S

    # Clamp tiles to the (padded) problem so tiny demos don't over-pad; real
    # shapes get 512-row / 1024-vocab tiles (multiples of 8 / 128, tv a
    # multiple of 512 keeps pass-2 stores unmasked lane-dense).
    tm_eff = min(tm, _round_up(M, 8))
    tv_eff = min(tv, _round_up(V, 128))
    # Keep >= 2 row tiles (when M allows) so the "parallel" row axis is
    # sharded across both v7x TensorCores instead of serializing on one.
    if M > 8 and _round_up(M, 8) // tm_eff < 2:
        tm_eff = max(8, _round_up(_round_up(M, 8) // 2, 8))
    M_pad = _round_up(M, tm_eff)
    V_pad = _round_up(V, tv_eff)

    # bf16 inputs for the MXU fast path; accumulation stays f32 in-kernel.
    x2 = x.reshape(M, H).astype(jnp.bfloat16)
    if M_pad != M:
        x2 = jnp.pad(x2, ((0, M_pad - M), (0, 0)))
    w2 = weight_t.astype(jnp.bfloat16)
    b2 = bias.astype(jnp.float32).reshape(1, V)
    if V_pad != V:
        # Padded vocab columns get a hugely negative bias so they never win
        # the running max nor contribute to the sum-exp.
        w2 = jnp.pad(w2, ((0, 0), (0, V_pad - V)))
        b2 = jnp.pad(b2, ((0, 0), (0, V_pad - V)), constant_values=_NEG_BIG)

    grid_rows = M_pad // tm_eff
    grid_vocab = V_pad // tv_eff

    # Under v7x's 64 MiB physical VMEM; v5e/v6e (128 MiB) have more headroom.
    vmem_limit = 48 * 1024 * 1024

    # Grid is (vocab, rows): vocab is the OUTER axis, so the weight / bias
    # tiles (index_map depends only on `v`) stay resident in VMEM across the
    # entire inner row sweep -> weight is DMA'd from HBM once per pass.
    x_spec = pl.BlockSpec((tm_eff, H), lambda v, i: (i, 0))
    w_spec = pl.BlockSpec((H, tv_eff), lambda v, i: (0, v))
    b_spec = pl.BlockSpec((1, tv_eff), lambda v, i: (0, v))
    lse_spec = pl.BlockSpec((tm_eff, 1), lambda v, i: (i, 0))

    # ---- Pass 1: per-row logsumexp (online reduction over vocab tiles). ----
    lse = pl.pallas_call(
        _lse_kernel,
        out_shape=jax.ShapeDtypeStruct((M_pad, 1), jnp.float32),
        grid_spec=pltpu.PrefetchScalarGridSpec(
            num_scalar_prefetch=0,
            grid=(grid_vocab, grid_rows),
            in_specs=[x_spec, w_spec, b_spec],
            out_specs=lse_spec,
            scratch_shapes=[
                pltpu.VMEM((grid_rows, tm_eff, 1), jnp.float32),
                pltpu.VMEM((grid_rows, tm_eff, 1), jnp.float32),
            ],
        ),
        compiler_params=pltpu.CompilerParams(
            dimension_semantics=("arbitrary", "parallel"),
            vmem_limit_bytes=vmem_limit,
        ),
    )(x2, w2, b2)

    # ---- Pass 2: recompute logits tiles, write log-probs exactly once. ----
    out = pl.pallas_call(
        _out_kernel,
        out_shape=jax.ShapeDtypeStruct((M_pad, V_pad), out_dtype),
        grid_spec=pltpu.PrefetchScalarGridSpec(
            num_scalar_prefetch=0,
            grid=(grid_vocab, grid_rows),
            in_specs=[x_spec, w_spec, b_spec, lse_spec],
            out_specs=pl.BlockSpec((tm_eff, tv_eff), lambda v, i: (i, v)),
        ),
        compiler_params=pltpu.CompilerParams(
            dimension_semantics=("parallel", "parallel"),
            vmem_limit_bytes=vmem_limit,
        ),
    )(x2, w2, b2, lse)

    return out[:M, :V].reshape(B, S, V)


if __name__ == "__main__":
    # Small shapes consistent with the module: batch=2, seq=8, hidden=32, vocab=128.
    B, S, H, V = 2, 8, 32, 128

    key = jax.random.PRNGKey(0)
    kx, kw, kb = jax.random.split(key, 3)

    x = jax.random.normal(kx, (B, S, H), dtype=jnp.float32)
    # PyTorch Linear(hidden, vocab) weight is (V, H); we pass it transposed
    # as (H, V) so the vocab dim maps onto the 128-lane axis.
    weight = jax.random.normal(kw, (V, H), dtype=jnp.float32) * (1.0 / jnp.sqrt(H))
    bias = jax.random.normal(kb, (V,), dtype=jnp.float32) * 0.01
    weight_t = weight.T

    # Default (bf16-output) run.
    out_bf16 = masked_language_model(x, weight_t, bias)
    out_bf16 = jax.block_until_ready(out_bf16)
    assert out_bf16.shape == (B, S, V)
    assert out_bf16.dtype == jnp.bfloat16

    # f32-output run for a tighter numerical check.
    out_f32 = jax.block_until_ready(
        masked_language_model(x, weight_t, bias, out_dtype=jnp.float32))

    # Reference using the same bf16-input / f32-accumulate contraction.
    logits_ref = (jnp.dot(x.astype(jnp.bfloat16).reshape(B * S, H),
                          weight_t.astype(jnp.bfloat16),
                          preferred_element_type=jnp.float32)
                  .reshape(B, S, V) + bias)
    ref = jax.nn.log_softmax(logits_ref, axis=-1)
    assert jnp.allclose(out_f32, ref, atol=2e-3, rtol=2e-3), \
        float(jnp.max(jnp.abs(out_f32 - ref)))
    assert jnp.allclose(out_bf16.astype(jnp.float32), ref, atol=1e-1, rtol=2e-2), \
        float(jnp.max(jnp.abs(out_bf16.astype(jnp.float32) - ref)))

    # Loose check against the original module's full-f32 math.
    ref_f32 = jax.nn.log_softmax(x @ weight_t + bias, axis=-1)
    assert jnp.allclose(out_f32, ref_f32, atol=5e-2, rtol=5e-2)

    print("KERNEL_OK")
</pallas_src>

<mosaic_0001>
module attributes {stable_mosaic.version = 11 : i64} {
  func.func @_lse_kernel(%arg0: i32, %arg1: i32, %arg2: memref<8x32xbf16, #tpu.memory_space<vmem>>, %arg3: memref<32x128xbf16, #tpu.memory_space<vmem>>, %arg4: memref<1x128xf32, #tpu.memory_space<vmem>>, %arg5: memref<8x1xf32, #tpu.memory_space<vmem>>, %arg6: memref<2x8x1xf32, #tpu.memory_space<vmem>>, %arg7: memref<2x8x1xf32, #tpu.memory_space<vmem>>) attributes {dimension_semantics = [#tpu.dimension_semantics<arbitrary>, #tpu.dimension_semantics<parallel>], iteration_bounds = array<i64: 1, 2>, scalar_prefetch = 0 : i64, scratch_operands = 2 : i64, tpu.core_type = #tpu.core_type<tc>, window_params = [{transform_indices = @transform_0, window_bounds = array<i64: 8, 32>}, {transform_indices = @transform_1, window_bounds = array<i64: 32, 128>}, {transform_indices = @transform_2, window_bounds = array<i64: 1, 128>}, {transform_indices = @transform_3, window_bounds = array<i64: 8, 1>}]} {
    %c0_i32 = arith.constant 0 : i32
    %0 = arith.cmpi eq, %arg0, %c0_i32 : i32
    %1 = arith.extui %0 : i1 to i32
    %c0_i32_0 = arith.constant 0 : i32
    %2 = arith.cmpi ne, %1, %c0_i32_0 : i32
    scf.if %2 {
      %cst_18 = arith.constant 0xFF800000 : f32
      %38 = vector.broadcast %cst_18 : f32 to vector<8x1xf32>
      %39 = arith.index_cast %arg1 : i32 to index
      %c0_19 = arith.constant 0 : index
      %c0_20 = arith.constant 0 : index
      %40 = vector.load %arg6[%39, %c0_19, %c0_20] : memref<2x8x1xf32, #tpu.memory_space<vmem>>, vector<1x8x1xf32>
      %41 = vector.shape_cast %40 : vector<1x8x1xf32> to vector<8x1xf32>
      %42 = vector.shape_cast %38 : vector<8x1xf32> to vector<1x8x1xf32>
      tpu.vector_store %arg6[%39, %c0_19, %c0_20], %42 {strides = array<i32>} : memref<2x8x1xf32, #tpu.memory_space<vmem>>, vector<1x8x1xf32>,
      %cst_21 = arith.constant 0.000000e+00 : f32
      %43 = vector.broadcast %cst_21 : f32 to vector<8x1xf32>
      %44 = arith.index_cast %arg1 : i32 to index
      %c0_22 = arith.constant 0 : index
      %c0_23 = arith.constant 0 : index
      %45 = vector.load %arg7[%44, %c0_22, %c0_23] : memref<2x8x1xf32, #tpu.memory_space<vmem>>, vector<1x8x1xf32>
      %46 = vector.shape_cast %45 : vector<1x8x1xf32> to vector<8x1xf32>
      %47 = vector.shape_cast %43 : vector<8x1xf32> to vector<1x8x1xf32>
      tpu.vector_store %arg7[%44, %c0_22, %c0_23], %47 {strides = array<i32>} : memref<2x8x1xf32, #tpu.memory_space<vmem>>, vector<1x8x1xf32>,
    } else {
    }
    %c0 = arith.constant 0 : index
    %c0_1 = arith.constant 0 : index
    %3 = vector.load %arg2[%c0, %c0_1] : memref<8x32xbf16, #tpu.memory_space<vmem>>, vector<8x32xbf16>
    %c0_2 = arith.constant 0 : index
    %c0_3 = arith.constant 0 : index
    %4 = vector.load %arg3[%c0_2, %c0_3] : memref<32x128xbf16, #tpu.memory_space<vmem>>, vector<32x128xbf16>
    %cst = arith.constant dense<0.000000e+00> : vector<8x128xf32>
    %5 = tpu.matmul %3, %4, %cst {dimension_numbers = #tpu.dot_dimension_numbers<[1], [0], [0], [1], [0, 0, 1, 1], [], []>} : vector<8x32xbf16>, vector<32x128xbf16>, vector<8x128xf32> -> vector<8x128xf32>
    %c0_4 = arith.constant 0 : index
    %c0_5 = arith.constant 0 : index
    %6 = vector.load %arg4[%c0_4, %c0_5] : memref<1x128xf32, #tpu.memory_space<vmem>>, vector<1x128xf32>
    %7 = vector.broadcast %6 : vector<1x128xf32> to vector<8x128xf32>
    %8 = arith.addf %5, %7 : vector<8x128xf32>
    %9 = arith.index_cast %arg1 : i32 to index
    %c0_6 = arith.constant 0 : index
    %c0_7 = arith.constant 0 : index
    %10 = vector.load %arg6[%9, %c0_6, %c0_7] : memref<2x8x1xf32, #tpu.memory_space<vmem>>, vector<1x8x1xf32>
    %11 = vector.shape_cast %10 : vector<1x8x1xf32> to vector<8x1xf32>
    %cst_8 = arith.constant dense<0xFF800000> : vector<8xf32>
    %12 = vector.multi_reduction <maximumf>, %8, %cst_8 [1] : vector<8x128xf32> to vector<8xf32>
    %13 = vector.shape_cast %12 : vector<8xf32> to vector<8x1xf32>
    %14 = arith.maximumf %11, %13 : vector<8x1xf32>
    %15 = arith.index_cast %arg1 : i32 to index
    %c0_9 = arith.constant 0 : index
    %c0_10 = arith.constant 0 : index
    %16 = vector.load %arg7[%15, %c0_9, %c0_10] : memref<2x8x1xf32, #tpu.memory_space<vmem>>, vector<1x8x1xf32>
    %17 = vector.shape_cast %16 : vector<1x8x1xf32> to vector<8x1xf32>
    %18 = arith.subf %11, %14 : vector<8x1xf32>
    %19 = math.exp %18 : vector<8x1xf32>
    %20 = arith.mulf %17, %19 : vector<8x1xf32>
    %21 = vector.broadcast %14 : vector<8x1xf32> to vector<8x128xf32>
    %22 = arith.subf %8, %21 : vector<8x128xf32>
    %23 = math.exp %22 : vector<8x128xf32>
    %cst_11 = arith.constant dense<0.000000e+00> : vector<8xf32>
    %24 = vector.multi_reduction <add>, %23, %cst_11 [1] : vector<8x128xf32> to vector<8xf32>
    %25 = vector.shape_cast %24 : vector<8xf32> to vector<8x1xf32>
    %26 = arith.addf %20, %25 : vector<8x1xf32>
    %27 = arith.index_cast %arg1 : i32 to index
    %c0_12 = arith.constant 0 : index
    %c0_13 = arith.constant 0 : index
    %28 = vector.load %arg7[%27, %c0_12, %c0_13] : memref<2x8x1xf32, #tpu.memory_space<vmem>>, vector<1x8x1xf32>
    %29 = vector.shape_cast %28 : vector<1x8x1xf32> to vector<8x1xf32>
    %30 = vector.shape_cast %26 : vector<8x1xf32> to vector<1x8x1xf32>
    tpu.vector_store %arg7[%27, %c0_12, %c0_13], %30 {strides = array<i32>} : memref<2x8x1xf32, #tpu.memory_space<vmem>>, vector<1x8x1xf32>,
    %31 = arith.index_cast %arg1 : i32 to index
    %c0_14 = arith.constant 0 : index
    %c0_15 = arith.constant 0 : index
    %32 = vector.load %arg6[%31, %c0_14, %c0_15] : memref<2x8x1xf32, #tpu.memory_space<vmem>>, vector<1x8x1xf32>
    %33 = vector.shape_cast %32 : vector<1x8x1xf32> to vector<8x1xf32>
    %34 = vector.shape_cast %14 : vector<8x1xf32> to vector<1x8x1xf32>
    tpu.vector_store %arg6[%31, %c0_14, %c0_15], %34 {strides = array<i32>} : memref<2x8x1xf32, #tpu.memory_space<vmem>>, vector<1x8x1xf32>,
    %c0_i32_16 = arith.constant 0 : i32
    %35 = arith.cmpi eq, %arg0, %c0_i32_16 : i32
    %36 = arith.extui %35 : i1 to i32
    %c0_i32_17 = arith.constant 0 : i32
    %37 = arith.cmpi ne, %36, %c0_i32_17 : i32
    scf.if %37 {
      %38 = arith.index_cast %arg1 : i32 to index
      %c0_18 = arith.constant 0 : index
      %c0_19 = arith.constant 0 : index
      %39 = vector.load %arg6[%38, %c0_18, %c0_19] : memref<2x8x1xf32, #tpu.memory_space<vmem>>, vector<1x8x1xf32>
      %40 = vector.shape_cast %39 : vector<1x8x1xf32> to vector<8x1xf32>
      %41 = arith.index_cast %arg1 : i32 to index
      %c0_20 = arith.constant 0 : index
      %c0_21 = arith.constant 0 : index
      %42 = vector.load %arg7[%41, %c0_20, %c0_21] : memref<2x8x1xf32, #tpu.memory_space<vmem>>, vector<1x8x1xf32>
      %43 = vector.shape_cast %42 : vector<1x8x1xf32> to vector<8x1xf32>
      %44 = math.log %43 : vector<8x1xf32>
      %45 = arith.addf %40, %44 : vector<8x1xf32>
      %c0_22 = arith.constant 0 : index
      %c0_23 = arith.constant 0 : index
      %46 = vector.load %arg5[%c0_22, %c0_23] : memref<8x1xf32, #tpu.memory_space<vmem>>, vector<8x1xf32>
      tpu.vector_store %arg5[%c0_22, %c0_23], %45 {strides = array<i32>} : memref<8x1xf32, #tpu.memory_space<vmem>>, vector<8x1xf32>,
    } else {
    }
    return
  }
  func.func @transform_0(%arg0: i32, %arg1: i32) -> (i32, i32) {
    %c0_i32 = arith.constant 0 : i32
    %c0_i32_0 = arith.constant 0 : i32
    return %arg1, %c0_i32 : i32, i32
  }
  func.func @transform_1(%arg0: i32, %arg1: i32) -> (i32, i32) {
    %c0_i32 = arith.constant 0 : i32
    %c0_i32_0 = arith.constant 0 : i32
    return %c0_i32, %arg0 : i32, i32
  }
  func.func @transform_2(%arg0: i32, %arg1: i32) -> (i32, i32) {
    %c0_i32 = arith.constant 0 : i32
    %c0_i32_0 = arith.constant 0 : i32
    return %c0_i32, %arg0 : i32, i32
  }
  func.func @transform_3(%arg0: i32, %arg1: i32) -> (i32, i32) {
    %c0_i32 = arith.constant 0 : i32
    %c0_i32_0 = arith.constant 0 : i32
    return %arg1, %c0_i32 : i32, i32
  }
}

</mosaic_0001>

<llo_original>
// kernel: tpu_custom_call.1
$region0: #{tpu_custom_call.1}
  #allocation0 [shape = 'u32[]', space=smem, size = 0x4, offset = 0x4, fixed_abs, tag = 'smem constant byte address 0x4 - core index']
  #allocation1 [shape = 'u32[144,128]{1,0:T(1,128)}', space=vmem, size = 0x12000, scoped, tag = 'internal scratch']
  #allocation2 [shape = 'f32[2,8,1]{2,1,0:T(8,128)}', space=vmem, size = 0x2000, scoped, tag = 'scratch operand']
  #allocation3 [shape = 'f32[2,8,1]{2,1,0:T(8,128)}', space=vmem, size = 0x2000, scoped, tag = 'scratch operand']
  %s0 = inlined_call_operand.hbm [shape: bf16[16,32], index: 0, kind: input, shape index: {}]
  %s1 = inlined_call_operand.hbm [shape: bf16[32,128], index: 1, kind: input, shape index: {}]
  %s2 = inlined_call_operand.vmem [shape: f32[1,128], index: 2, kind: input, shape index: {}]
  %s3 = inlined_call_operand.vmem [shape: f32[16,1], index: 3, kind: output, shape index: {}]
  %s4 = sld [smem:[#allocation0]]
  $region61: #{tpu_custom_call.1} parent=0
    _
  %s6 = ssub.s32 1, %s4
  %s7 = scalar_select 0, %s6, %s4
  $region1: #{tpu_custom_call.1} parent=0
    #allocation4 [shape = 'u8[4096]{0}', space=vmem, size = 0x1000, scoped, tag = 'input window, operand 0']
    #allocation5 [shape = 's32[2]{0}', space=sflag, size = 0x8, scoped, tag = 'scoped memory for tpu_custom_call.1']
    #allocation6 [shape = 'u8[8192]{0}', space=vmem, size = 0x2000, scoped, tag = 'input window, operand 1, single buffered']
    #allocation7 [shape = 's32[1]{0}', space=sflag, size = 0x4, scoped, tag = 'scoped memory for tpu_custom_call.1']
    %8 = vsyncpa [#allocation5], 0
    %s9 = scalar_lea.sflag [#allocation5], 1
    %10 = vsyncpa %s9, 0
    %11 = vsyncpa [#allocation7], 0
    loop: start=0, step=1, limit=4
    $region2: #{tpu_custom_call.1} parent=1 // loop_pre_header
      _
    $region3: #{tpu_custom_call.1} parent=1 // loop_header
      %s13 = sphi 0, %s17
      %p14 = scmp.ge.s32.totalorder %s13, 4
      %s20 = sphi 0, %s32
      %s21 = sphi 0, %s28
      %s22 = sphi 0, %s20
      %s23 = sphi 0, %s21
      %s24 = sphi 0, %s22
      %s25 = sphi 0, %s23
      %s35 = sphi 0, %s37
      %s38 = sphi 0, %s35
      %s39 = sphi 0, %s38
      %s55 = sphi 0, %s39
      %s61 = sphi 0, %s63
      %s64 = sphi 0, %s61
      %s65 = sphi 0, %s64
      %s81 = sphi 0, %s65
      %s87 = sphi 0, %s89
      %s90 = sphi 0, %s87
      %s91 = sphi 0, %s90
      %s107 = sphi 0, %s91
      %s113 = sphi 0, %s115
      %s116 = sphi 0, %s113
      %s117 = sphi 0, %s116
      %s133 = sphi 0, %s117
    $region4: #{tpu_custom_call.1} parent=1 // loop_header_branch
      %16 = sbr.rel (%p14) target = $region8
    $region5: #{tpu_custom_call.1} parent=1 // loop_body
      %s18 = ssub.s32 %s13, 1
      %s19 = ssub.s32 %s13, 2
      %s26 = sadd.s32 1, %s21
      %p27 = scmp.ge.s32.totalorder %s26, 2
      %s28 = scalar_select %p27, 0, %s26
      %s29 = sadd.s32 1, %s20
      %s30 = scalar_select %p27, %s29, %s20
      %p31 = scmp.ge.s32.totalorder %s30, 1
      %s32 = scalar_select %p31, 0, %s30
      %s33 = ssub.s32 %s21, %s28
      %p34 = scmp.eq.s32.totalorder %s33, 0
      %s36 = sadd.s32 %s35, 1
      %s37 = scalar_select %p34, %s35, %s36
      %p40 = pneg %p34
      %p41 = scmp.eq.s32.totalorder %s13, 1
      %p42 = por %p40, %p41
      %p43 = scmp.ne.s32.totalorder %s35, %s38
      %p44 = scmp.eq.s32.totalorder %s13, 0
      %p45 = por %p43, %p44
      %p46 = scmp.ne.s32.totalorder %s35, %s38
      %p47 = scmp.eq.s32.totalorder %s18, 1
      %p48 = por %p46, %p47
      %p49 = scmp.ne.s32.totalorder %s38, %s39
      %p50 = scmp.eq.s32.totalorder %s18, 0
      %p51 = por %p49, %p50
      %p52 = scmp.ne.s32.totalorder %s38, %s39
      %p53 = scmp.eq.s32.totalorder %s19, 1
      %p54 = por %p52, %p53
      %p56 = scmp.ne.s32.totalorder %s39, %s55
      %p57 = scmp.eq.s32.totalorder %s19, 0
      %p58 = por %p56, %p57
      %s59 = ssub.s32 %s20, %s32
      %p60 = scmp.eq.s32.totalorder %s59, 0
      %s62 = sadd.s32 %s61, 1
      %s63 = scalar_select %p60, %s61, %s62
      %p66 = pneg %p60
      %p67 = scmp.eq.s32.totalorder %s13, 1
      %p68 = por %p66, %p67
      %p69 = scmp.ne.s32.totalorder %s61, %s64
      %p70 = scmp.eq.s32.totalorder %s13, 0
      %p71 = por %p69, %p70
      %p72 = scmp.ne.s32.totalorder %s61, %s64
      %p73 = scmp.eq.s32.totalorder %s18, 1
      %p74 = por %p72, %p73
      %p75 = scmp.ne.s32.totalorder %s64, %s65
      %p76 = scmp.eq.s32.totalorder %s18, 0
      %p77 = por %p75, %p76
      %p78 = scmp.ne.s32.totalorder %s64, %s65
      %p79 = scmp.eq.s32.totalorder %s19, 1
      %p80 = por %p78, %p79
      %p82 = scmp.ne.s32.totalorder %s65, %s81
      %p83 = scmp.eq.s32.totalorder %s19, 0
      %p84 = por %p82, %p83
      %s85 = ssub.s32 %s20, %s32
      %p86 = scmp.eq.s32.totalorder %s85, 0
      %s88 = sadd.s32 %s87, 1
      %s89 = scalar_select %p86, %s87, %s88
      %p92 = pneg %p86
      %p93 = scmp.eq.s32.totalorder %s13, 1
      %p94 = por %p92, %p93
      %p95 = scmp.ne.s32.totalorder %s87, %s90
      %p96 = scmp.eq.s32.totalorder %s13, 0
      %p97 = por %p95, %p96
      %p98 = scmp.ne.s32.totalorder %s87, %s90
      %p99 = scmp.eq.s32.totalorder %s18, 1
      %p100 = por %p98, %p99
      %p101 = scmp.ne.s32.totalorder %s90, %s91
      %p102 = scmp.eq.s32.totalorder %s18, 0
      %p103 = por %p101, %p102
      %p104 = scmp.ne.s32.totalorder %s90, %s91
      %p105 = scmp.eq.s32.totalorder %s19, 1
      %p106 = por %p104, %p105
      %p108 = scmp.ne.s32.totalorder %s91, %s107
      %p109 = scmp.eq.s32.totalorder %s19, 0
      %p110 = por %p108, %p109
      %s111 = ssub.s32 %s21, %s28
      %p112 = scmp.eq.s32.totalorder %s111, 0
      %s114 = sadd.s32 %s113, 1
      %s115 = scalar_select %p112, %s113, %s114
      %p118 = pneg %p112
      %p119 = scmp.eq.s32.totalorder %s13, 1
      %p120 = por %p118, %p119
      %p121 = scmp.ne.s32.totalorder %s113, %s116
      %p122 = scmp.eq.s32.totalorder %s13, 0
      %p123 = por %p121, %p122
      %p124 = scmp.ne.s32.totalorder %s113, %s116
      %p125 = scmp.eq.s32.totalorder %s18, 1
      %p126 = por %p124, %p125
      %p127 = scmp.ne.s32.totalorder %s116, %s117
      %p128 = scmp.eq.s32.totalorder %s18, 0
      %p129 = por %p127, %p128
      %p130 = scmp.ne.s32.totalorder %s116, %s117
      %p131 = scmp.eq.s32.totalorder %s19, 1
      %p132 = por %p130, %p131
      %p134 = scmp.ne.s32.totalorder %s117, %s133
      %p135 = scmp.eq.s32.totalorder %s19, 0
      %p136 = por %p134, %p135
      %p137 = scmp.le.s32.totalorder 1, %s13
      %p138 = scmp.lt.s32.totalorder %s13, 3
      %p139 = pnand %p137, %p138
      %p140 = pneg %p139
      // Predicated region
      $region9: #{tpu_custom_call.1} parent=5 // pred_check
        _
      $region10: #{tpu_custom_call.1} parent=5 // pred_check_branch
        %142 = sbr.rel (%p139) target = $region12
      $region11: #{tpu_custom_call.1} parent=5 // pred_region
        %s143 = ssub.s32 %s13, 1
        // Predicated region
        $region13: #{tpu_custom_call.1} parent=11 // pred_check
          %p144 = pneg %p77
        $region14: #{tpu_custom_call.1} parent=11 // pred_check_branch
          %146 = sbr.rel (%p144) target = $region16
        $region15: #{tpu_custom_call.1} parent=11 // pred_region
          %s148 = ssub.s32 256, 256
          %149 = vsyncadd [#allocation7], %s148
          %s150 = smul.addr %s22, 64
          %s151 = scalar_lea.hbm %s1, %s150
          %s152 = sshll.u32 [#allocation6], 4
          %s153 = int_to_ptr.vmem [resolvable:$true] %s152
          %158 = dma.hbm_to_vmem [thread:$0]  %s151, 256, %s153, [#allocation7], 64, 64, 4
        $region16: #{tpu_custom_call.1} parent=11 // pred_fallthru
          _
        // Predicated region
        $region17: #{tpu_custom_call.1} parent=11 // pred_check
          %p159 = pneg %p103
        $region18: #{tpu_custom_call.1} parent=11 // pred_check_branch
          %161 = sbr.rel (%p159) target = $region20
        $region19: #{tpu_custom_call.1} parent=11 // pred_region
          %p162 = scmp.lt.s32.totalorder %s22, 0
          %s163 = scalar_select %p162, %s22, 0
          %s164 = scalar_lea.vmem %s2, %s163
        $region20: #{tpu_custom_call.1} parent=11 // pred_fallthru
          _
      $region12: #{tpu_custom_call.1} parent=5 // pred_fallthru
        _
      %p165 = scmp.lt.s32.totalorder %s13, 2
      // Predicated region
      $region21: #{tpu_custom_call.1} parent=5 // pred_check
        %p166 = pneg %p165
      $region22: #{tpu_custom_call.1} parent=5 // pred_check_branch
        %168 = sbr.rel (%p166) target = $region24
      $region23: #{tpu_custom_call.1} parent=5 // pred_region
        // Predicated region
        $region25: #{tpu_custom_call.1} parent=23 // pred_check
          %p169 = pneg %p45
        $region26: #{tpu_custom_call.1} parent=23 // pred_check_branch
          %171 = sbr.rel (%p169) target = $region28
        $region27: #{tpu_custom_call.1} parent=23 // pred_region
          %s172 = sand.u32 %s35, 1
          %s173 = scalar_lea.sflag [#allocation5], %s172
          %s174 = sand.u32 %s35, 1
          %s175 = smul.addr %s174, 4
          %s176 = scalar_lea.vmem [#allocation4], %s175
          %s178 = ssub.s32 64, 64
          %179 = vsyncadd %s173, %s178
          %s180 = smul.addr %s21, 64
          %s181 = scalar_lea.hbm %s0, %s180
          %s183 = sshll.u32 %s176, 4
          %s184 = int_to_ptr.vmem [resolvable:$true] %s183
          %186 = dma.hbm_to_vmem [thread:$0]  %s181, 64, %s184, %s173
        $region28: #{tpu_custom_call.1} parent=23 // pred_fallthru
          _
      $region24: #{tpu_custom_call.1} parent=5 // pred_fallthru
        _
      %p187 = scmp.le.s32.totalorder 1, %s13
      %p188 = scmp.lt.s32.totalorder %s13, 3
      %p189 = pnand %p187, %p188
      %p190 = pneg %p189
      // Predicated region
      $region29: #{tpu_custom_call.1} parent=5 // pred_check
        _
      $region30: #{tpu_custom_call.1} parent=5 // pred_check_branch
        %192 = sbr.rel (%p189) target = $region32
      $region31: #{tpu_custom_call.1} parent=5 // pred_region
        %s193 = ssub.s32 %s13, 1
        %s194 = sand.u32 %s38, 1
        %s195 = scalar_lea.sflag [#allocation5], %s194
        %s196 = sand.u32 %s38, 1
        %s197 = smul.addr %s196, 4
        %s198 = scalar_lea.vmem [#allocation4], %s197
        // Predicated region
        $region33: #{tpu_custom_call.1} parent=31 // pred_check
          %p199 = pneg %p51
        $region34: #{tpu_custom_call.1} parent=31 // pred_check_branch
          %201 = sbr.rel (%p199) target = $region36
        $region35: #{tpu_custom_call.1} parent=31 // pred_region
          %202 = dma.done %s195, 64
        $region36: #{tpu_custom_call.1} parent=31 // pred_fallthru
          _
        // Predicated region
        $region37: #{tpu_custom_call.1} parent=31 // pred_check
          %p203 = pneg %p77
        $region38: #{tpu_custom_call.1} parent=31 // pred_check_branch
          %205 = sbr.rel (%p203) target = $region40
        $region39: #{tpu_custom_call.1} parent=31 // pred_region
          %206 = dma.done [#allocation7], 256
        $region40: #{tpu_custom_call.1} parent=31 // pred_fallthru
          _
        %s207 = sand.u32 %s38, 1
        %s208 = scalar_lea.sflag [#allocation5], %s207
        %s209 = sand.u32 %s38, 1
        %s210 = smul.addr %s209, 4
        %s211 = scalar_lea.vmem [#allocation4], %s210
        %p212 = pneg %p51
        %p213 = pneg %p48
        %p214 = pneg %p77
        %p215 = pneg %p74
        %p216 = scmp.lt.s32.totalorder %s22, 0
        %s217 = scalar_select %p216, %s22, 0
        %s218 = scalar_lea.vmem %s2, %s217
        %p219 = pneg %p103
        %p220 = pneg %p100
        %p221 = pneg %p129
        %p222 = pneg %p126
        %p223 = scmp.lt.s32.totalorder %s23, 1
        %s224 = scalar_select %p223, %s23, 1
        %s225 = smul.addr %s224, 8
        %s226 = scalar_lea.vmem %s3, %s225
        %p227 = scmp.lt.s32.totalorder %s22, 0
        %s228 = scalar_select %p227, %s22, 0
        %s229 = scalar_lea.vmem %s2, %s228
        %p230 = scmp.lt.s32.totalorder %s23, 1
        %s231 = scalar_select %p230, %s23, 1
        %s232 = smul.addr %s231, 8
        %s233 = scalar_lea.vmem %s3, %s232
        %p235 = scmp.eq.s32.totalorder %s22, 0
        // Predicated region
        $region41: #{tpu_custom_call.1} parent=31 // pred_check
          %p236 = pneg %p235
        $region42: #{tpu_custom_call.1} parent=31 // pred_check_branch
          %238 = sbr.rel (%p236) target = $region44
        $region43: #{tpu_custom_call.1} parent=31 // pred_region
          %s239 = smul.u32 %s23, 8
          %s240 = scalar_lea.vmem [#allocation2], %s239
          %vm241 = vcmask 7168
          %242 = vst.msk [vmem:[%s240] sm:$0xff] %vm241, -inf
          %s243 = scalar_lea.vmem [#allocation3], %s239
          %244 = vst.msk [vmem:[%s243] sm:$0xff] %vm241, 0.0
        $region44: #{tpu_custom_call.1} parent=31 // pred_fallthru
          _
        %v245 = vld [vmem:[%s198] sm:$0xf]
        %v246 = vld [vmem:[#allocation6] sm:$0xf]
        %v247 = vld [vmem:[#allocation6 + $0x4] sm:$0xf]
        %v248 = vld [vmem:[#allocation6 + $0x8] sm:$0xf]
        %v249 = vld [vmem:[#allocation6 + $0xc] sm:$0xf]
        %v250 = vld [vmem:[%s229] sm:$0x1]
        %v252 = vlaneseq
        %v253 = vshrl.u32 %v252, 7
        %v254 = vsub.s32 0, %v253
        %v255 = vrot.slane %v250, %v254
        %v261 = vunpack.c.l.b16 %v246
        %v262 = vunpack.c.l.b16 %v247
        %v263 = vunpack.c.l.b16 %v248
        %v264 = vunpack.c.l.b16 %v249
        %v265 = vpack.c.b16 %v262, %v261
        %v266 = vpack.c.b16 %v264, %v263
        %vm269 = vcmask 261120
        %v271 = vsel %vm269, %v245, 0
        %273 = vmatprep.subr.bf16.mxu0 0
        %274 = vmatpush1.bf16.msra.mxu0 %v265
        %275 = vmatprep.subr.bf16.mxu0 0
        %276 = vmatpush1.bf16.msra.mxu0 %v266
        %277 = vmatprep.subr.bf16.mxu0 0
        %278 = vmatpush1.bf16.msra.mxu0 0
        %279 = vmatprep.subr.bf16.mxu0 0
        %280 = vmatpush1.bf16.msra.mxu0 0
        %281 = vmatprep.subr.bf16.mxu0 0
        %282 = vmatpush1.bf16.msra.mxu0 0
        %283 = vmatprep.subr.bf16.mxu0 0
        %284 = vmatpush1.bf16.msra.mxu0 0
        %285 = vmatprep.subr.bf16.mxu0 0
        %286 = vmatpush1.bf16.msra.mxu0 0
        %287 = vmatprep.subr.bf16.mxu0 0
        %288 = vmatpush1.bf16.msra.mxu0 0
        %289 = vmatprep.subr.bf16.mxu0 0
        %290 = vmatpush1.bf16.msra.mxu0 0
        %291 = vmatprep.subr.bf16.mxu0 0
        %292 = vmatpush1.bf16.msra.mxu0 0
        %293 = vmatprep.subr.bf16.mxu0 0
        %294 = vmatpush1.bf16.msra.mxu0 0
        %295 = vmatprep.subr.bf16.mxu0 0
        %296 = vmatpush1.bf16.msra.mxu0 0
        %297 = vmatprep.subr.bf16.mxu0 0
        %298 = vmatpush1.bf16.msra.mxu0 0
        %299 = vmatprep.subr.bf16.mxu0 0
        %300 = vmatpush1.bf16.msra.mxu0 0
        %301 = vmatprep.subr.bf16.mxu0 0
        %302 = vmatpush1.bf16.msra.mxu0 0
        %303 = vmatprep.subr.bf16.mxu0 0
        %304 = vmatpush1.bf16.msra.mxu0 0
        %305 = vmatprep.mubr.bf16.mxu0 0
        %306 = vmatmul.mubr.bf16.gmra.mrb[0].mxu0 %v271
        %v307 = vpop.f32.mrb[0].mxu0
        %v308 = vadd.f32 %v255, %v307
        %v309 = vpop.f32.mrb[0].mxu0
        %v310 = vpop.f32.mrb[0].mxu0
        %v311 = vpop.f32.mrb[0].mxu0
        %312 = vdwg.mxu0
        %s313 = smul.u32 %s23, 8
        %s314 = scalar_lea.vmem [#allocation2], %s313
        %v315 = vld [vmem:[%s314] sm:$0xff]
        %316 = vmax.xlane.f32.xlu0 %v308
        %v317 = vpop.xlane.xlu0 %316
        %v318 = vmax.f32 %v315, %v317
        %s319 = scalar_lea.vmem [#allocation3], %s313
        %v320 = vld [vmem:[%s319] sm:$0xff]
        %v321 = vsub.f32 %v315, %v318
        %v322 = vmul.f32 %v321, 1.442695
        %v323 = vpow.pop %v322
        %v324 = vmul.f32 %v320, %v323
        %326 = vset.pattern.permute.xlu0 0
        %327 = vperm.xlu0 %326, %v318
        %v328 = vpop.permute.xlu0 %327
        %v330 = vsub.f32 %v308, %v328
        %v331 = vmul.f32 %v330, 1.442695
        %v332 = vpow.pop %v331
        %333 = vadd.xlane.f32.xlu0 %v332
        %v334 = vpop.xlane.xlu0 %333
        %v335 = vadd.f32 %v324, %v334
        %vm336 = vcmask 7168
        %337 = vst.msk [vmem:[%s319] sm:$0xff] %vm336, %v335
        %338 = vst.msk [vmem:[%s314] sm:$0xff] %vm336, %v318
        // Predicated region
        $region45: #{tpu_custom_call.1} parent=31 // pred_check
          %p339 = pneg %p235
        $region46: #{tpu_custom_call.1} parent=31 // pred_check_branch
          %341 = sbr.rel (%p339) target = $region48
        $region47: #{tpu_custom_call.1} parent=31 // pred_region
          %v342 = vld [vmem:[%s314] sm:$0xff]
          %v343 = vld [vmem:[%s319] sm:$0xff]
          %v344 = vlog2.pop %v343
          %v345 = vmul.f32 %v344, 0.6931472
          %v346 = vadd.f32 %v342, %v345
          %347 = vst.msk [vmem:[%s233] sm:$0xff] %vm336, %v346
        $region48: #{tpu_custom_call.1} parent=31 // pred_fallthru
          _
        %p348 = scmp.lt.s32.totalorder %s23, 1
        %s349 = scalar_select %p348, %s23, 1
        %s350 = smul.addr %s349, 8
        %s351 = scalar_lea.vmem %s3, %s350
        // Predicated region
        $region49: #{tpu_custom_call.1} parent=31 // pred_check
          %p352 = pneg %p126
        $region50: #{tpu_custom_call.1} parent=31 // pred_check_branch
          %354 = sbr.rel (%p352) target = $region52
        $region51: #{tpu_custom_call.1} parent=31 // pred_region
          _
        $region52: #{tpu_custom_call.1} parent=31 // pred_fallthru
          _
      $region32: #{tpu_custom_call.1} parent=5 // pred_fallthru
        _
      %p355 = scmp.le.s32.totalorder 2, %s13
      // Predicated region
      $region53: #{tpu_custom_call.1} parent=5 // pred_check
        %p356 = pneg %p355
      $region54: #{tpu_custom_call.1} parent=5 // pred_check_branch
        %358 = sbr.rel (%p356) target = $region56
      $region55: #{tpu_custom_call.1} parent=5 // pred_region
        %s359 = ssub.s32 %s13, 2
        // Predicated region
        $region57: #{tpu_custom_call.1} parent=55 // pred_check
          %p360 = pneg %p132
        $region58: #{tpu_custom_call.1} parent=55 // pred_check_branch
          %362 = sbr.rel (%p360) target = $region60
        $region59: #{tpu_custom_call.1} parent=55 // pred_region
          %p363 = scmp.lt.s32.totalorder %s25, 1
          %s364 = scalar_select %p363, %s25, 1
          %s365 = smul.addr %s364, 8
          %s366 = scalar_lea.vmem %s3, %s365
        $region60: #{tpu_custom_call.1} parent=55 // pred_fallthru
          _
      $region56: #{tpu_custom_call.1} parent=5 // pred_fallthru
        _
    $region6: #{tpu_custom_call.1} parent=1 // loop_footer
      %s17 = sadd.s32 1, %s13
    $region7: #{tpu_custom_call.1} parent=1 // loop_footer_branch
      %12 = sbr.rel target = $region3
    $region8: #{tpu_custom_call.1} parent=1 // loop_exit
      _
    %367 = vsyncpa [#allocation5], 1
    %s368 = scalar_lea.sflag [#allocation5], 1
    %369 = vsyncpa %s368, 1
    %370 = vsyncpa [#allocation7], 1

</llo_original>
